<compile_context>
chip_gen: v7x
topology: tpu7x:2x2x1
jax: 0.10.0
libtpu: 0.0.40
codegen_flags: <defaults>
</compile_context>

<pallas_src>
import math

import jax
import jax.numpy as jnp
from jax.experimental import pallas as pl
from jax.experimental.pallas import tpu as pltpu

_LANES = 128


def _drop_path_kernel(scale_ref, x_ref, o_ref):
    # scale_ref: (bB, 1)   per-sample scale, 0.0 or 1/keep_prob, in x.dtype
    # x_ref:     (bB, fB)  tile of the flattened (B, F) input
    # o_ref:     (bB, fB)  matching output tile
    o_ref[...] = (x_ref[...] * scale_ref[...]).astype(o_ref.dtype)


def _vmem_plan():
    """Pick a per-buffer block budget and scoped-VMEM limit per generation."""
    try:
        cap = pltpu.get_tpu_info().vmem_capacity_bytes
    except Exception:
        cap = 64 << 20  # conservative fallback (v7x-sized VMEM)
    # ~8 MiB/buffer on 128 MiB VMEM (v5e/v6e), ~4 MiB on 64 MiB VMEM (v7x).
    block_budget = int(max(2 << 20, min(8 << 20, cap // 16)))
    # in + out, double-buffered ~= 4x block; leave headroom for scratch.
    vmem_limit = int(min(cap // 2, 48 << 20))
    return block_budget, vmem_limit


def _choose_blocks(B, F, itemsize, budget_bytes):
    """Pick (batch_block, feature_block): one tile ~= budget_bytes, and every
    block dim is either a multiple of the hardware tile or the full array dim."""
    f_full = -(-F // _LANES) * _LANES            # feature dim rounded up to 128
    bB = B if B <= 8 else 8
    fB = (budget_bytes // (bB * itemsize)) // _LANES * _LANES
    fB = max(_LANES, min(fB, f_full))
    if fB == f_full and B > 8:
        # Whole feature dim fits in one tile: widen over batch instead so
        # small-F inputs don't degenerate into tiny per-sample tiles.
        grow = budget_bytes // max(1, f_full * itemsize)
        grow = (grow // 8) * 8
        bB = B if grow >= B else max(8, grow)
    return bB, fB


def drop_path_forward(x, drop_prob=0.0, training=False, key=None):
    """Pallas DropPath forward.  x: (B, ...) any rank."""
    if drop_prob == 0.0 or not training:
        # Identity path, exactly like the PyTorch module's early return.
        return x
    if key is None:
        raise ValueError("drop_path_forward requires a PRNG key when "
                         "training=True and drop_prob > 0.")

    keep_prob = 1.0 - drop_prob
    orig_shape = x.shape
    B = x.shape[0]
    F = int(math.prod(x.shape[1:]))

    # Per-sample Bernoulli(keep_prob) in {0,1}: floor(keep_prob + U[0,1)),
    # mirroring torch's (keep_prob + rand).floor_().  The divide by keep_prob
    # is folded into this tiny (B, 1) scale so the kernel does one mul/elem.
    u = jax.random.uniform(key, (B,), dtype=jnp.float32)
    keep = jnp.floor(keep_prob + u)
    scale = (keep * (1.0 / keep_prob)).astype(x.dtype).reshape(B, 1)

    # Flat (B, F) view: free for contiguous layouts -> no pad / slice copies.
    x2 = x.reshape(B, F)
    itemsize = jnp.dtype(x.dtype).itemsize
    block_budget, vmem_limit = _vmem_plan()
    bB, fB = _choose_blocks(B, F, itemsize, block_budget)

    grid = (pl.cdiv(B, bB), pl.cdiv(F, fB))

    # TODO(synk): expose input_output_aliases for callers that can donate x
    # (saves the second full-size HBM allocation inside residual blocks).
    out2 = pl.pallas_call(
        _drop_path_kernel,
        out_shape=jax.ShapeDtypeStruct((B, F), x.dtype),
        grid_spec=pltpu.PrefetchScalarGridSpec(
            num_scalar_prefetch=0,
            grid=grid,
            in_specs=[
                pl.BlockSpec((bB, 1), lambda i, j: (i, 0)),
                pl.BlockSpec((bB, fB), lambda i, j: (i, j)),
            ],
            out_specs=pl.BlockSpec((bB, fB), lambda i, j: (i, j)),
        ),
        compiler_params=pltpu.CompilerParams(
            dimension_semantics=("parallel", "parallel"),
            vmem_limit_bytes=vmem_limit),
    )(scale, x2)

    return out2.reshape(orig_shape)


def drop_path_reference(x, drop_prob, training, key):
    """Pure-JAX reference mirroring the PyTorch drop_path (same RNG draw)."""
    if drop_prob == 0.0 or not training:
        return x
    keep_prob = 1.0 - drop_prob
    B = x.shape[0]
    u = jax.random.uniform(key, (B,), dtype=jnp.float32)
    random_tensor = jnp.floor(keep_prob + u)
    bshape = (B,) + (1,) * (x.ndim - 1)
    return x / keep_prob * random_tensor.reshape(bshape)


if __name__ == "__main__":
    key = jax.random.PRNGKey(0)
    kx, kx2, kx3, kd = jax.random.split(key, 4)

    # Conv-style feature map (DropPath is shape-agnostic).
    x = jax.random.normal(kx, (2, 4, 16, 16), dtype=jnp.float32)
    drop_prob = 0.3

    # Training path (stochastic depth active) -> runs the Pallas kernel.
    out = jax.block_until_ready(
        drop_path_forward(x, drop_prob=drop_prob, training=True, key=kd))
    ref = drop_path_reference(x, drop_prob, True, kd)
    assert out.shape == x.shape
    assert jnp.allclose(out, ref, atol=1e-5, rtol=1e-5), "training-path mismatch"

    # Per-sample size 8*5*7 = 280 (not a multiple of 128) -> exercises the
    # masked edge block (no wrapper pad / slice copies anymore).
    x2 = jax.random.normal(kx2, (4, 8, 5, 7), dtype=jnp.float32)
    out2 = jax.block_until_ready(
        drop_path_forward(x2, drop_prob=0.5, training=True, key=kd))
    ref2 = drop_path_reference(x2, 0.5, True, kd)
    assert jnp.allclose(out2, ref2, atol=1e-5, rtol=1e-5), "edge-block mismatch"

    # Large batch / tiny feature count -> exercises the batch-blocking path.
    x3 = jax.random.normal(kx3, (16, 8, 8), dtype=jnp.float32)
    out3 = jax.block_until_ready(
        drop_path_forward(x3, drop_prob=0.2, training=True, key=kd))
    ref3 = drop_path_reference(x3, 0.2, True, kd)
    assert jnp.allclose(out3, ref3, atol=1e-5, rtol=1e-5), "batch-block mismatch"

    # Eval / drop_prob=0 is identity (early return, same as the torch module).
    out_eval = drop_path_forward(x, drop_prob=drop_prob, training=False, key=kd)
    assert jnp.array_equal(out_eval, x), "eval path must be identity"

    print("KERNEL_OK")
</pallas_src>

<mosaic_0001>
module attributes {stable_mosaic.version = 11 : i64} {
  func.func @_drop_path_kernel(%arg0: i32, %arg1: i32, %arg2: memref<2x1xf32, #tpu.memory_space<vmem>>, %arg3: memref<2x1024xf32, #tpu.memory_space<vmem>>, %arg4: memref<2x1024xf32, #tpu.memory_space<vmem>>) attributes {dimension_semantics = [#tpu.dimension_semantics<parallel>, #tpu.dimension_semantics<parallel>], iteration_bounds = array<i64: 1, 1>, scalar_prefetch = 0 : i64, scratch_operands = 0 : i64, tpu.core_type = #tpu.core_type<tc>, window_params = [{transform_indices = @transform_0, window_bounds = array<i64: 2, 1>}, {transform_indices = @transform_1, window_bounds = array<i64: 2, 1024>}, {transform_indices = @transform_2, window_bounds = array<i64: 2, 1024>}]} {
    %c0 = arith.constant 0 : index
    %c0_0 = arith.constant 0 : index
    %0 = vector.load %arg3[%c0, %c0_0] : memref<2x1024xf32, #tpu.memory_space<vmem>>, vector<2x1024xf32>
    %c0_1 = arith.constant 0 : index
    %c0_2 = arith.constant 0 : index
    %1 = vector.load %arg2[%c0_1, %c0_2] : memref<2x1xf32, #tpu.memory_space<vmem>>, vector<2x1xf32>
    %2 = vector.broadcast %1 : vector<2x1xf32> to vector<2x1024xf32>
    %3 = arith.mulf %0, %2 : vector<2x1024xf32>
    %c0_3 = arith.constant 0 : index
    %c0_4 = arith.constant 0 : index
    %4 = vector.load %arg4[%c0_3, %c0_4] : memref<2x1024xf32, #tpu.memory_space<vmem>>, vector<2x1024xf32>
    tpu.vector_store %arg4[%c0_3, %c0_4], %3 {strides = array<i32>} : memref<2x1024xf32, #tpu.memory_space<vmem>>, vector<2x1024xf32>,
    return
  }
  func.func @transform_0(%arg0: i32, %arg1: i32) -> (i32, i32) {
    %c0_i32 = arith.constant 0 : i32
    %c0_i32_0 = arith.constant 0 : i32
    return %arg0, %c0_i32 : i32, i32
  }
  func.func @transform_1(%arg0: i32, %arg1: i32) -> (i32, i32) {
    %c0_i32 = arith.constant 0 : i32
    return %arg0, %arg1 : i32, i32
  }
  func.func @transform_2(%arg0: i32, %arg1: i32) -> (i32, i32) {
    %c0_i32 = arith.constant 0 : i32
    return %arg0, %arg1 : i32, i32
  }
}

</mosaic_0001>

<llo_original>
// kernel: tpu_custom_call.1
$region0: #{tpu_custom_call.1}
  #allocation0 [shape = 'u32[]', space=smem, size = 0x4, offset = 0x4, fixed_abs, tag = 'smem constant byte address 0x4 - core index']
  #allocation1 [shape = 'u32[144,128]{1,0:T(1,128)}', space=vmem, size = 0x12000, scoped, tag = 'internal scratch']
  %s0 = inlined_call_operand.vmem [shape: f32[2,1], index: 0, kind: input, shape index: {}]
  %s1 = inlined_call_operand.hbm [shape: f32[2,1024], index: 1, kind: input, shape index: {}]
  %s2 = inlined_call_operand.hbm [shape: f32[2,1024], index: 2, kind: output, shape index: {}]
  %s3 = sld [smem:[#allocation0]]
  $region22: #{tpu_custom_call.1} parent=0
    _
  %s5 = ssub.s32 1, %s3
  %s6 = scalar_select 0, %s5, %s3
  $region1: #{tpu_custom_call.1} parent=0
    #allocation2 [shape = 'u8[8192]{0}', space=vmem, size = 0x2000, scoped, tag = 'input window, operand 1, single buffered']
    #allocation3 [shape = 's32[1]{0}', space=sflag, size = 0x4, scoped, tag = 'scoped memory for tpu_custom_call.1']
    #allocation4 [shape = 's32[1]{0}', space=sflag, size = 0x4, scoped, tag = 'scoped memory for tpu_custom_call.1']
    #allocation5 [shape = 'u8[8192]{0}', space=vmem, size = 0x2000, scoped, tag = 'output window, operand 0, single buffered']
    %7 = vsyncpa [#allocation3], 0
    %8 = vsyncpa [#allocation4], 0
    // Predicated region
    $region2: #{tpu_custom_call.1} parent=1 // pred_check
      _
    $region3: #{tpu_custom_call.1} parent=1 // pred_check_branch
      %10 = sbr.rel (0) target = $region5
    $region4: #{tpu_custom_call.1} parent=1 // pred_region
      _
    $region5: #{tpu_custom_call.1} parent=1 // pred_fallthru
      _
    // Predicated region
    $region6: #{tpu_custom_call.1} parent=1 // pred_check
      _
    $region7: #{tpu_custom_call.1} parent=1 // pred_check_branch
      %12 = sbr.rel (0) target = $region9
    $region8: #{tpu_custom_call.1} parent=1 // pred_region
      %s14 = ssub.s32 256, 256
      %15 = vsyncadd [#allocation3], %s14
      %s17 = sshll.u32 [#allocation2], 4
      %s18 = int_to_ptr.vmem [resolvable:$true] %s17
      %20 = dma.hbm_to_vmem [thread:$0]  %s1, 256, %s18, [#allocation3]
    $region9: #{tpu_custom_call.1} parent=1 // pred_fallthru
      _
    // Predicated region
    $region10: #{tpu_custom_call.1} parent=1 // pred_check
      _
    $region11: #{tpu_custom_call.1} parent=1 // pred_check_branch
      %22 = sbr.rel (0) target = $region13
    $region12: #{tpu_custom_call.1} parent=1 // pred_region
      %23 = dma.done [#allocation3], 256
    $region13: #{tpu_custom_call.1} parent=1 // pred_fallthru
      _
    %v24 = vld [vmem:[#allocation2] sm:$0xff]
    %v25 = vld [vmem:[#allocation2 + $0x8] sm:$0xff]
    %v26 = vld [vmem:[%s0] sm:$0x3]
    %28 = vset.pattern.permute.xlu0 0
    %29 = vperm.xlu0 %28, %v26
    %v30 = vpop.permute.xlu0 %29
    %v32 = vunpack.c.l.s4 269488144
    %v33 = vunpack.c.0.s8 %v32
    %v34 = vlaneseq
    %v35 = vshrl.u32 %v34, 7
    %v36 = vsub.s32 %v33, %v35
    %v37 = vrot.slane %v30, %v36
    %v39 = vmul.f32 %v24, %v37
    %v40 = vmul.f32 %v25, %v37
    %41 = vst [vmem:[#allocation5] sm:$0xff] %v39
    %42 = vst [vmem:[#allocation5 + $0x8] sm:$0xff] %v40
    // Predicated region
    $region14: #{tpu_custom_call.1} parent=1 // pred_check
      _
    $region15: #{tpu_custom_call.1} parent=1 // pred_check_branch
      %44 = sbr.rel (0) target = $region17
    $region16: #{tpu_custom_call.1} parent=1 // pred_region
      %s46 = ssub.s32 256, 256
      %47 = vsyncadd [#allocation4], %s46
      %s49 = sshll.u32 [#allocation5], 4
      %s50 = int_to_ptr.vmem [resolvable:$true] %s49
      %52 = dma.vmem_to_hbm [thread:$0]  %s50, 256, %s2, [#allocation4]
    $region17: #{tpu_custom_call.1} parent=1 // pred_fallthru
      _
    // Predicated region
    $region18: #{tpu_custom_call.1} parent=1 // pred_check
      _
    $region19: #{tpu_custom_call.1} parent=1 // pred_check_branch
      %54 = sbr.rel (0) target = $region21
    $region20: #{tpu_custom_call.1} parent=1 // pred_region
      %55 = dma.done [#allocation4], 256
    $region21: #{tpu_custom_call.1} parent=1 // pred_fallthru
      _
    %56 = vsyncpa [#allocation3], 1
    %57 = vsyncpa [#allocation4], 1

</llo_original>
